<compile_context>
chip_gen: v7x
topology: tpu7x:2x2x1
jax: 0.10.0
libtpu: 0.0.40
codegen_flags: <defaults>
</compile_context>

<pallas_src>
import jax
import jax.numpy as jnp
from jax import lax
from jax.experimental import pallas as pl
from jax.experimental.pallas import tpu as pltpu


def gnn_r_kernel(x_ref, a_ref, gexp_ref, o_ref):
    """One grid step processes G batch groups.

    x_ref:    (G*na, d)        this step's rows of x
    a_ref:    (d, 16*na)       resident weight
    gexp_ref: (2*na, 8*na)     resident kron(., I2) expansion selector
    o_ref:    (G, 2*na, 8*na)  output slab (reshaped to (G, 4na, 4na) outside)
    """
    na = a_ref.shape[1] // 16
    n2 = 2 * na
    G = o_ref.shape[0]

    x = x_ref[...]
    a = a_ref[...]
    gexp = gexp_ref[...]

    # One shared MXU matmul for all G groups, f32 accumulation.
    z = jnp.dot(x, a, preferred_element_type=jnp.float32)        # (G*na, 16*na)
    # SiLU: z * sigmoid(z) == z * 0.5 * (1 + tanh(z/2)); single EUP op/element.
    m = z * (0.5 + 0.5 * jnp.tanh(0.5 * z))

    def col_block_sum(k0):
        return (m[:, (k0 + 0) * na:(k0 + 1) * na]
                + m[:, (k0 + 1) * na:(k0 + 2) * na]
                + m[:, (k0 + 2) * na:(k0 + 3) * na]
                + m[:, (k0 + 3) * na:(k0 + 4) * na])

    c11 = col_block_sum(0)                                        # (G*na, na)
    c12 = col_block_sum(4)
    c21 = col_block_sum(8)
    c22 = col_block_sum(12)

    top = jnp.concatenate([c11, c12], axis=1)                     # (G*na, 2*na)
    bot = jnp.concatenate([c21, c22], axis=1)                     # (G*na, 2*na)

    rows = lax.broadcasted_iota(jnp.int32, (n2, n2), 0)
    cols = lax.broadcasted_iota(jnp.int32, (n2, n2), 1)
    eye_mask = rows == cols

    # Small unrolled per-group epilogue; all slices / indices are static.
    for g in range(G):
        r0 = g * na
        s = jnp.concatenate([top[r0:r0 + na], bot[r0:r0 + na]], axis=0)  # (2na,2na)
        s2 = s * s
        q = s2 + s2.T                              # symmetrize: one XLU transpose
        dsum = jnp.sum(q, axis=1, keepdims=True)   # full row sums -> diagonal
        l2 = jnp.where(eye_mask, jnp.broadcast_to(dsum, (n2, n2)), -q)
        # kron(l2, I2) row-major == (l2 @ gexp) row-major; expansion on the MXU.
        o_ref[g] = jnp.dot(l2, gexp, preferred_element_type=jnp.float32)


def _expansion_selector(na, dtype=jnp.float32):
    """Gexp (2na, 8na) with (L2 @ Gexp).reshape(4na, 4na) == kron(L2, I2)."""
    j = jnp.arange(2 * na)[:, None]
    c = jnp.arange(8 * na)[None, :]
    even = (c < 4 * na) & (c == 2 * j)                 # rows 2i of the kron
    odd = (c >= 4 * na) & ((c - 4 * na) == 2 * j + 1)  # rows 2i+1 of the kron
    return (even | odd).astype(dtype)


def _pick_group_count(nb, na, target_rows):
    """Fuse enough groups to fill the MXU, but keep grid extent >= 2 if possible."""
    G = max(1, min(max(1, target_rows // na), max(1, nb // 2)))
    while nb % G:
        G -= 1
    if (G * na) % 8 and G != nb:
        # (8, 128) block-tiling: row tile must be a multiple of 8 or equal to
        # the full array; fall back to a single full-batch step otherwise.
        G = nb
    return G


def gnn_r_forward(x, A, *, matmul_dtype=None, target_rows=256):
    """Pallas forward for GNN_R.

    x: (B, d) with d % 4 == 0;  A: (d, 16*(d//4));  B % (d//4) == 0.
    matmul_dtype: optional dtype for the x @ A MXU inputs (jnp.bfloat16 is
      recommended on v6e/v7x); accumulation and the whole epilogue stay f32.
    target_rows: LHS rows per grid step (256 fills the v6e/v7x MXU; use 128
      on v5e).
    """
    B, d = x.shape
    assert d % 4 == 0, "d must be a multiple of 4"
    na = d // 4
    h = 16 * na
    assert A.shape == (d, h), "A must have shape (d, 4*d)"
    assert B % na == 0, "batch must be a multiple of na (= d // 4)"
    nb = B // na
    n2, n8 = 2 * na, 8 * na

    G = _pick_group_count(nb, na, target_rows)
    grid = (nb // G,)

    mm_dtype = jnp.float32 if matmul_dtype is None else jnp.dtype(matmul_dtype)
    xk = x.astype(mm_dtype)
    Ak = A.astype(mm_dtype)
    gexp = _expansion_selector(na, jnp.float32)

    itemsize = jnp.dtype(mm_dtype).itemsize
    # Generous VMEM budget: double-buffered x/out blocks, resident A and Gexp
    # (still allocated twice by the pipeline), plus intermediate headroom.
    vmem_est = (2 * G * na * d * itemsize          # x blocks
                + 2 * d * h * itemsize             # A
                + 2 * n2 * n8 * 4                  # Gexp
                + 2 * G * n2 * n8 * 4              # out blocks
                + 8 * G * na * h * 4)              # z / m / epilogue temps
    vmem_limit = int(min(max(2 * vmem_est, 16 * (1 << 20)), 64 * (1 << 20)))
    # TODO(synk): on v7x with very large na, single-buffer the invariant A
    # spec (pipeline_mode=pl.Buffered(1)) to halve its VMEM footprint.

    cost = pl.CostEstimate(
        flops=int(2 * B * d * h + nb * 2 * n2 * n2 * n8 + 8 * B * h),
        transcendentals=int(B * h),
        bytes_accessed=int((B * d + d * h) * itemsize
                           + n2 * n8 * 4 + nb * n2 * n8 * 4),
    )

    out = pl.pallas_call(
        gnn_r_kernel,
        out_shape=jax.ShapeDtypeStruct((nb, n2, n8), jnp.float32),
        grid_spec=pltpu.PrefetchScalarGridSpec(
            num_scalar_prefetch=0,
            grid=grid,
            in_specs=[
                pl.BlockSpec((G * na, d), lambda s: (s, 0)),   # x: G groups/step
                pl.BlockSpec((d, h), lambda s: (0, 0)),        # A: resident
                pl.BlockSpec((n2, n8), lambda s: (0, 0)),      # Gexp: resident
            ],
            out_specs=pl.BlockSpec((G, n2, n8), lambda s: (s, 0, 0)),
        ),
        compiler_params=pltpu.CompilerParams(
            dimension_semantics=("parallel",),
            vmem_limit_bytes=vmem_limit),
        cost_estimate=cost,
    )(xk, Ak, gexp)

    # Free row-major reshape: (nb, 2na, 8na) -> (nb, 4na, 4na) == kron(L2, I2).
    return out.reshape(nb, 4 * na, 4 * na)


def gnn_r_reference(x, A):
    """Pure-JAX transcription of the PyTorch GNN_R.forward (for validation)."""
    B, d = x.shape
    na = d // 4
    nb = B // na
    z = jnp.dot(x, A, precision=lax.Precision.HIGHEST)
    R = z * jax.nn.sigmoid(z)
    R = R.reshape(B, 16, na)
    R11 = R[:, 0:4].sum(1).reshape(nb, na, na)
    R12 = R[:, 4:8].sum(1).reshape(nb, na, na)
    R21 = R[:, 8:12].sum(1).reshape(nb, na, na)
    R22 = R[:, 12:16].sum(1).reshape(nb, na, na)

    def kron_eye2(M):
        zeros = jnp.zeros_like(M)
        even = jnp.stack([M, zeros], axis=-1).reshape(nb, na, 2 * na)
        odd = jnp.stack([zeros, M], axis=-1).reshape(nb, na, 2 * na)
        return jnp.stack([even, odd], axis=-2).reshape(nb, 2 * na, 2 * na)

    K11, K12, K21, K22 = map(kron_eye2, (R11, R12, R21, R22))
    Rfull = jnp.concatenate(
        [jnp.concatenate([K11, K21], axis=1),
         jnp.concatenate([K12, K22], axis=1)], axis=2)
    Rsq = Rfull ** 2
    Rupper = Rsq + jnp.swapaxes(Rsq, 1, 2)
    n = 4 * na
    eye_n = jnp.eye(n, dtype=x.dtype)
    Rdiag = Rupper * (1.0 - eye_n)
    Rout = eye_n * Rupper
    return Rout + eye_n * jnp.sum(Rdiag, axis=2, keepdims=True) - Rdiag


if __name__ == "__main__":
    # Small shapes consistent with the module: d = 4*na, h = 16*na, B = nb*na.
    na, nb = 8, 2
    d, h = 4 * na, 16 * na          # d = 32, h = 128
    B = nb * na                     # 16

    key = jax.random.PRNGKey(0)
    kx, ka, kx2 = jax.random.split(key, 3)
    x = jax.random.normal(kx, (B, d), dtype=jnp.float32)
    A = 0.01 * jax.random.normal(ka, (d, h), dtype=jnp.float32)

    # f32 path.
    out = jax.block_until_ready(gnn_r_forward(x, A))
    ref = gnn_r_reference(x, A)
    assert out.shape == (nb, 4 * na, 4 * na)
    err = float(jnp.max(jnp.abs(out - ref)))
    assert jnp.allclose(out, ref, rtol=1e-3, atol=1e-5), err

    # bf16 matmul-input path (recommended on v6e/v7x); f32 accumulate/epilogue.
    out_bf16 = jax.block_until_ready(gnn_r_forward(x, A, matmul_dtype=jnp.bfloat16))
    err_bf16 = float(jnp.max(jnp.abs(out_bf16 - ref)))
    assert jnp.allclose(out_bf16, ref, rtol=5e-2, atol=5e-4), err_bf16

    # Larger batch exercising group fusion (G > 1) and a multi-step grid.
    nb2 = 8
    B2 = nb2 * na
    x2 = jax.random.normal(kx2, (B2, d), dtype=jnp.float32)
    out2 = jax.block_until_ready(gnn_r_forward(x2, A))
    ref2 = gnn_r_reference(x2, A)
    assert out2.shape == (nb2, 4 * na, 4 * na)
    err2 = float(jnp.max(jnp.abs(out2 - ref2)))
    assert jnp.allclose(out2, ref2, rtol=1e-3, atol=1e-5), err2

    print("KERNEL_OK")
</pallas_src>

<mosaic_0001>
module attributes {stable_mosaic.version = 11 : i64} {
  func.func @gnn_r_kernel(%arg0: i32, %arg1: memref<8x32xf32, #tpu.memory_space<vmem>>, %arg2: memref<32x128xf32, #tpu.memory_space<vmem>>, %arg3: memref<16x64xf32, #tpu.memory_space<vmem>>, %arg4: memref<1x16x64xf32, #tpu.memory_space<vmem>>) attributes {dimension_semantics = [#tpu.dimension_semantics<parallel>], iteration_bounds = array<i64: 2>, scalar_prefetch = 0 : i64, scratch_operands = 0 : i64, tpu.core_type = #tpu.core_type<tc>, window_params = [{transform_indices = @transform_0, window_bounds = array<i64: 8, 32>}, {pipeline_mode = #tpu.pipeline_mode<synchronous>, transform_indices = @transform_1, window_bounds = array<i64: 32, 128>}, {pipeline_mode = #tpu.pipeline_mode<synchronous>, transform_indices = @transform_2, window_bounds = array<i64: 16, 64>}, {transform_indices = @transform_3, window_bounds = array<i64: 1, 16, 64>}]} {
    %c0 = arith.constant 0 : index
    %c0_0 = arith.constant 0 : index
    %0 = vector.load %arg1[%c0, %c0_0] : memref<8x32xf32, #tpu.memory_space<vmem>>, vector<8x32xf32>
    %c0_1 = arith.constant 0 : index
    %c0_2 = arith.constant 0 : index
    %1 = vector.load %arg2[%c0_1, %c0_2] : memref<32x128xf32, #tpu.memory_space<vmem>>, vector<32x128xf32>
    %c0_3 = arith.constant 0 : index
    %c0_4 = arith.constant 0 : index
    %2 = vector.load %arg3[%c0_3, %c0_4] : memref<16x64xf32, #tpu.memory_space<vmem>>, vector<16x64xf32>
    %cst = arith.constant dense<0.000000e+00> : vector<8x128xf32>
    %3 = tpu.matmul %0, %1, %cst {dimension_numbers = #tpu.dot_dimension_numbers<[1], [0], [0], [1], [0, 0, 1, 1], [], []>} : vector<8x32xf32>, vector<32x128xf32>, vector<8x128xf32> -> vector<8x128xf32>
    %cst_5 = arith.constant 5.000000e-01 : f32
    %4 = vector.broadcast %cst_5 : f32 to vector<8x128xf32>
    %5 = arith.mulf %4, %3 : vector<8x128xf32>
    %6 = math.tanh %5 : vector<8x128xf32>
    %cst_6 = arith.constant 5.000000e-01 : f32
    %7 = vector.broadcast %cst_6 : f32 to vector<8x128xf32>
    %8 = arith.mulf %7, %6 : vector<8x128xf32>
    %cst_7 = arith.constant 5.000000e-01 : f32
    %9 = vector.broadcast %cst_7 : f32 to vector<8x128xf32>
    %10 = arith.addf %9, %8 : vector<8x128xf32>
    %11 = arith.mulf %3, %10 : vector<8x128xf32>
    %12 = vector.extract_strided_slice %11 {offsets = [0, 0], sizes = [8, 8], strides = [1, 1]} : vector<8x128xf32> to vector<8x8xf32>
    %13 = vector.extract_strided_slice %11 {offsets = [0, 8], sizes = [8, 8], strides = [1, 1]} : vector<8x128xf32> to vector<8x8xf32>
    %14 = arith.addf %12, %13 : vector<8x8xf32>
    %15 = vector.extract_strided_slice %11 {offsets = [0, 16], sizes = [8, 8], strides = [1, 1]} : vector<8x128xf32> to vector<8x8xf32>
    %16 = arith.addf %14, %15 : vector<8x8xf32>
    %17 = vector.extract_strided_slice %11 {offsets = [0, 24], sizes = [8, 8], strides = [1, 1]} : vector<8x128xf32> to vector<8x8xf32>
    %18 = arith.addf %16, %17 : vector<8x8xf32>
    %19 = vector.extract_strided_slice %11 {offsets = [0, 32], sizes = [8, 8], strides = [1, 1]} : vector<8x128xf32> to vector<8x8xf32>
    %20 = vector.extract_strided_slice %11 {offsets = [0, 40], sizes = [8, 8], strides = [1, 1]} : vector<8x128xf32> to vector<8x8xf32>
    %21 = arith.addf %19, %20 : vector<8x8xf32>
    %22 = vector.extract_strided_slice %11 {offsets = [0, 48], sizes = [8, 8], strides = [1, 1]} : vector<8x128xf32> to vector<8x8xf32>
    %23 = arith.addf %21, %22 : vector<8x8xf32>
    %24 = vector.extract_strided_slice %11 {offsets = [0, 56], sizes = [8, 8], strides = [1, 1]} : vector<8x128xf32> to vector<8x8xf32>
    %25 = arith.addf %23, %24 : vector<8x8xf32>
    %26 = vector.extract_strided_slice %11 {offsets = [0, 64], sizes = [8, 8], strides = [1, 1]} : vector<8x128xf32> to vector<8x8xf32>
    %27 = vector.extract_strided_slice %11 {offsets = [0, 72], sizes = [8, 8], strides = [1, 1]} : vector<8x128xf32> to vector<8x8xf32>
    %28 = arith.addf %26, %27 : vector<8x8xf32>
    %29 = vector.extract_strided_slice %11 {offsets = [0, 80], sizes = [8, 8], strides = [1, 1]} : vector<8x128xf32> to vector<8x8xf32>
    %30 = arith.addf %28, %29 : vector<8x8xf32>
    %31 = vector.extract_strided_slice %11 {offsets = [0, 88], sizes = [8, 8], strides = [1, 1]} : vector<8x128xf32> to vector<8x8xf32>
    %32 = arith.addf %30, %31 : vector<8x8xf32>
    %33 = vector.extract_strided_slice %11 {offsets = [0, 96], sizes = [8, 8], strides = [1, 1]} : vector<8x128xf32> to vector<8x8xf32>
    %34 = vector.extract_strided_slice %11 {offsets = [0, 104], sizes = [8, 8], strides = [1, 1]} : vector<8x128xf32> to vector<8x8xf32>
    %35 = arith.addf %33, %34 : vector<8x8xf32>
    %36 = vector.extract_strided_slice %11 {offsets = [0, 112], sizes = [8, 8], strides = [1, 1]} : vector<8x128xf32> to vector<8x8xf32>
    %37 = arith.addf %35, %36 : vector<8x8xf32>
    %38 = vector.extract_strided_slice %11 {offsets = [0, 120], sizes = [8, 8], strides = [1, 1]} : vector<8x128xf32> to vector<8x8xf32>
    %39 = arith.addf %37, %38 : vector<8x8xf32>
    %40 = tpu.concatenate %18, %25 in 1 : vector<8x8xf32>, vector<8x8xf32> -> vector<8x16xf32>
    %41 = tpu.concatenate %32, %39 in 1 : vector<8x8xf32>, vector<8x8xf32> -> vector<8x16xf32>
    %42 = tpu.iota {dimensions = array<i32: 0>} : vector<16x16xi32>
    %43 = tpu.iota {dimensions = array<i32: 1>} : vector<16x16xi32>
    %44 = arith.cmpi eq, %42, %43 : vector<16x16xi32>
    %45 = tpu.concatenate %40, %41 in 0 : vector<8x16xf32>, vector<8x16xf32> -> vector<16x16xf32>
    %46 = arith.mulf %45, %45 : vector<16x16xf32>
    %47 = tpu.transpose %46, [1, 0] : vector<16x16xf32> -> vector<16x16xf32>
    %48 = arith.addf %46, %47 : vector<16x16xf32>
    %cst_8 = arith.constant dense<0.000000e+00> : vector<16xf32>
    %49 = vector.multi_reduction <add>, %48, %cst_8 [1] : vector<16x16xf32> to vector<16xf32>
    %50 = vector.shape_cast %49 : vector<16xf32> to vector<16x1xf32>
    %51 = vector.shape_cast %50 : vector<16x1xf32> to vector<16x1xf32>
    %52 = vector.broadcast %51 : vector<16x1xf32> to vector<16x16xf32>
    %cst_9 = arith.constant 0.000000e+00 : f32
    %53 = vector.broadcast %cst_9 : f32 to vector<16x16xf32>
    %54 = arith.subf %53, %48 : vector<16x16xf32>
    %55 = arith.select %44, %52, %54 : vector<16x16xi1>, vector<16x16xf32>
    %cst_10 = arith.constant dense<0.000000e+00> : vector<16x64xf32>
    %56 = tpu.matmul %55, %2, %cst_10 {dimension_numbers = #tpu.dot_dimension_numbers<[1], [0], [0], [1], [0, 0, 1, 1], [], []>} : vector<16x16xf32>, vector<16x64xf32>, vector<16x64xf32> -> vector<16x64xf32>
    %c0_11 = arith.constant 0 : index
    %c0_12 = arith.constant 0 : index
    %c0_13 = arith.constant 0 : index
    %57 = vector.load %arg4[%c0_11, %c0_12, %c0_13] : memref<1x16x64xf32, #tpu.memory_space<vmem>>, vector<1x16x64xf32>
    %58 = vector.shape_cast %57 : vector<1x16x64xf32> to vector<16x64xf32>
    %59 = vector.shape_cast %56 : vector<16x64xf32> to vector<1x16x64xf32>
    tpu.vector_store %arg4[%c0_11, %c0_12, %c0_13], %59 {strides = array<i32>} : memref<1x16x64xf32, #tpu.memory_space<vmem>>, vector<1x16x64xf32>,
    return
  }
  func.func @transform_0(%arg0: i32) -> (i32, i32) {
    %c0_i32 = arith.constant 0 : i32
    %c0_i32_0 = arith.constant 0 : i32
    return %arg0, %c0_i32 : i32, i32
  }
  func.func @transform_1(%arg0: i32) -> (i32, i32) {
    %c0_i32 = arith.constant 0 : i32
    %c0_i32_0 = arith.constant 0 : i32
    %c0_i32_1 = arith.constant 0 : i32
    return %c0_i32, %c0_i32_0 : i32, i32
  }
  func.func @transform_2(%arg0: i32) -> (i32, i32) {
    %c0_i32 = arith.constant 0 : i32
    %c0_i32_0 = arith.constant 0 : i32
    %c0_i32_1 = arith.constant 0 : i32
    return %c0_i32, %c0_i32_0 : i32, i32
  }
  func.func @transform_3(%arg0: i32) -> (i32, i32, i32) {
    %c0_i32 = arith.constant 0 : i32
    %c0_i32_0 = arith.constant 0 : i32
    %c0_i32_1 = arith.constant 0 : i32
    return %arg0, %c0_i32, %c0_i32_0 : i32, i32, i32
  }
}

</mosaic_0001>

<llo_original>
// kernel: tpu_custom_call.1
$region0: #{tpu_custom_call.1}
  #allocation0 [shape = 'u32[]', space=smem, size = 0x4, offset = 0x4, fixed_abs, tag = 'smem constant byte address 0x4 - core index']
  #allocation1 [shape = 'u32[144,128]{1,0:T(1,128)}', space=vmem, size = 0x12000, scoped, tag = 'internal scratch']
  %s0 = inlined_call_operand.hbm [shape: f32[16,32], index: 0, kind: input, shape index: {}]
  %s1 = inlined_call_operand.hbm [shape: f32[32,128], index: 1, kind: input, shape index: {}]
  %s2 = inlined_call_operand.hbm [shape: f32[16,64], index: 2, kind: input, shape index: {}]
  %s3 = inlined_call_operand.hbm [shape: f32[2,16,64], index: 3, kind: output, shape index: {}]
  %s4 = sld [smem:[#allocation0]]
  $region57: #{tpu_custom_call.1} parent=0
    _
  %s6 = ssub.s32 1, %s4
  %s7 = scalar_select 0, %s6, %s4
  $region1: #{tpu_custom_call.1} parent=0
    #allocation2 [shape = 'u8[8192]{0}', space=vmem, size = 0x2000, scoped, tag = 'input window, operand 0']
    #allocation3 [shape = 's32[2]{0}', space=sflag, size = 0x8, scoped, tag = 'scoped memory for tpu_custom_call.1']
    #allocation4 [shape = 's32[2]{0}', space=sflag, size = 0x8, scoped, tag = 'scoped memory for tpu_custom_call.1']
    #allocation5 [shape = 'u8[16384]{0}', space=vmem, size = 0x4000, scoped, tag = 'input window, operand 1, single buffered']
    #allocation6 [shape = 's32[1]{0}', space=sflag, size = 0x4, scoped, tag = 'scoped memory for tpu_custom_call.1']
    #allocation7 [shape = 'u8[8192]{0}', space=vmem, size = 0x2000, scoped, tag = 'input window, operand 2, single buffered']
    #allocation8 [shape = 'u8[16384]{0}', space=vmem, size = 0x4000, scoped, tag = 'output window, operand 0']
    %8 = vsyncpa [#allocation3], 0
    %s9 = scalar_lea.sflag [#allocation3], 1
    %10 = vsyncpa %s9, 0
    %11 = vsyncpa [#allocation6], 0
    %12 = vsyncpa [#allocation4], 0
    %s13 = scalar_lea.sflag [#allocation4], 1
    %14 = vsyncpa %s13, 0
    loop: start=0, step=1, limit=4
    $region2: #{tpu_custom_call.1} parent=1 // loop_pre_header
      _
    $region3: #{tpu_custom_call.1} parent=1 // loop_header
      %s16 = sphi 0, %s20
      %p17 = scmp.ge.s32.totalorder %s16, 4
      %s26 = sphi 0, %s28
      %s29 = sphi 0, %s26
      %s30 = sphi 0, %s29
      %s46 = sphi 0, %s30
      %s50 = sphi 0, %s50
      %s52 = sphi 0, %s50
      %s53 = sphi 0, %s52
      %s67 = sphi 0, %s53
      %s71 = sphi 0, %s71
      %s73 = sphi 0, %s71
      %s74 = sphi 0, %s73
      %s88 = sphi 0, %s74
      %s94 = sphi 0, %s96
      %s97 = sphi 0, %s94
      %s98 = sphi 0, %s97
      %s114 = sphi 0, %s98
    $region4: #{tpu_custom_call.1} parent=1 // loop_header_branch
      %19 = sbr.rel (%p17) target = $region8
    $region5: #{tpu_custom_call.1} parent=1 // loop_body
      %s21 = ssub.s32 %s16, 1
      %s22 = ssub.s32 %s16, 2
      %s23 = sadd.s32 %s16, 1
      %s24 = ssub.s32 %s16, %s23
      %p25 = scmp.eq.s32.totalorder %s24, 0
      %s27 = sadd.s32 %s26, 1
      %s28 = scalar_select %p25, %s26, %s27
      %p31 = pneg %p25
      %p32 = scmp.eq.s32.totalorder %s16, 1
      %p33 = por %p31, %p32
      %p34 = scmp.ne.s32.totalorder %s26, %s29
      %p35 = scmp.eq.s32.totalorder %s16, 0
      %p36 = por %p34, %p35
      %p37 = scmp.ne.s32.totalorder %s26, %s29
      %p38 = scmp.eq.s32.totalorder %s21, 1
      %p39 = por %p37, %p38
      %p40 = scmp.ne.s32.totalorder %s29, %s30
      %p41 = scmp.eq.s32.totalorder %s21, 0
      %p42 = por %p40, %p41
      %p43 = scmp.ne.s32.totalorder %s29, %s30
      %p44 = scmp.eq.s32.totalorder %s22, 1
      %p45 = por %p43, %p44
      %p47 = scmp.ne.s32.totalorder %s30, %s46
      %p48 = scmp.eq.s32.totalorder %s22, 0
      %p49 = por %p47, %p48
      %s51 = sadd.s32 %s50, 1
      %p54 = scmp.eq.s32.totalorder %s16, 1
      %p55 = scmp.ne.s32.totalorder %s50, %s52
      %p56 = scmp.eq.s32.totalorder %s16, 0
      %p57 = por %p55, %p56
      %p58 = scmp.ne.s32.totalorder %s50, %s52
      %p59 = scmp.eq.s32.totalorder %s21, 1
      %p60 = por %p58, %p59
      %p61 = scmp.ne.s32.totalorder %s52, %s53
      %p62 = scmp.eq.s32.totalorder %s21, 0
      %p63 = por %p61, %p62
      %p64 = scmp.ne.s32.totalorder %s52, %s53
      %p65 = scmp.eq.s32.totalorder %s22, 1
      %p66 = por %p64, %p65
      %p68 = scmp.ne.s32.totalorder %s53, %s67
      %p69 = scmp.eq.s32.totalorder %s22, 0
      %p70 = por %p68, %p69
      %s72 = sadd.s32 %s71, 1
      %p75 = scmp.eq.s32.totalorder %s16, 1
      %p76 = scmp.ne.s32.totalorder %s71, %s73
      %p77 = scmp.eq.s32.totalorder %s16, 0
      %p78 = por %p76, %p77
      %p79 = scmp.ne.s32.totalorder %s71, %s73
      %p80 = scmp.eq.s32.totalorder %s21, 1
      %p81 = por %p79, %p80
      %p82 = scmp.ne.s32.totalorder %s73, %s74
      %p83 = scmp.eq.s32.totalorder %s21, 0
      %p84 = por %p82, %p83
      %p85 = scmp.ne.s32.totalorder %s73, %s74
      %p86 = scmp.eq.s32.totalorder %s22, 1
      %p87 = por %p85, %p86
      %p89 = scmp.ne.s32.totalorder %s74, %s88
      %p90 = scmp.eq.s32.totalorder %s22, 0
      %p91 = por %p89, %p90
      %s92 = ssub.s32 %s16, %s23
      %p93 = scmp.eq.s32.totalorder %s92, 0
      %s95 = sadd.s32 %s94, 1
      %s96 = scalar_select %p93, %s94, %s95
      %p99 = pneg %p93
      %p100 = scmp.eq.s32.totalorder %s16, 1
      %p101 = por %p99, %p100
      %p102 = scmp.ne.s32.totalorder %s94, %s97
      %p103 = scmp.eq.s32.totalorder %s16, 0
      %p104 = por %p102, %p103
      %p105 = scmp.ne.s32.totalorder %s94, %s97
      %p106 = scmp.eq.s32.totalorder %s21, 1
      %p107 = por %p105, %p106
      %p108 = scmp.ne.s32.totalorder %s97, %s98
      %p109 = scmp.eq.s32.totalorder %s21, 0
      %p110 = por %p108, %p109
      %p111 = scmp.ne.s32.totalorder %s97, %s98
      %p112 = scmp.eq.s32.totalorder %s22, 1
      %p113 = por %p111, %p112
      %p115 = scmp.ne.s32.totalorder %s98, %s114
      %p116 = scmp.eq.s32.totalorder %s22, 0
      %p117 = por %p115, %p116
      %p118 = scmp.le.s32.totalorder 1, %s16
      %p119 = scmp.lt.s32.totalorder %s16, 3
      %p120 = pnand %p118, %p119
      %p121 = pneg %p120
      // Predicated region
      $region9: #{tpu_custom_call.1} parent=5 // pred_check
        _
      $region10: #{tpu_custom_call.1} parent=5 // pred_check_branch
        %123 = sbr.rel (%p120) target = $region12
      $region11: #{tpu_custom_call.1} parent=5 // pred_region
        %s124 = ssub.s32 %s16, 1
        // Predicated region
        $region13: #{tpu_custom_call.1} parent=11 // pred_check
          %p125 = pneg %p63
        $region14: #{tpu_custom_call.1} parent=11 // pred_check_branch
          %127 = sbr.rel (%p125) target = $region16
        $region15: #{tpu_custom_call.1} parent=11 // pred_region
          %s129 = ssub.s32 512, 512
          %130 = vsyncadd [#allocation6], %s129
          %s131 = sshll.u32 [#allocation5], 4
          %s132 = int_to_ptr.vmem [resolvable:$true] %s131
          %137 = dma.hbm_to_vmem [thread:$0]  %s1, 512, %s132, [#allocation6], 128, 128, 8
        $region16: #{tpu_custom_call.1} parent=11 // pred_fallthru
          _
        // Predicated region
        $region17: #{tpu_custom_call.1} parent=11 // pred_check
          %p138 = pneg %p84
        $region18: #{tpu_custom_call.1} parent=11 // pred_check_branch
          %140 = sbr.rel (%p138) target = $region20
        $region19: #{tpu_custom_call.1} parent=11 // pred_region
          %s142 = ssub.s32 256, 256
          %143 = vsyncadd [#allocation6], %s142
          %s144 = sshll.u32 [#allocation7], 4
          %s145 = int_to_ptr.vmem [resolvable:$true] %s144
          %150 = dma.hbm_to_vmem [thread:$0]  %s2, 256, %s145, [#allocation6], 128, 128, 8
        $region20: #{tpu_custom_call.1} parent=11 // pred_fallthru
          _
      $region12: #{tpu_custom_call.1} parent=5 // pred_fallthru
        _
      %p151 = scmp.lt.s32.totalorder %s16, 2
      // Predicated region
      $region21: #{tpu_custom_call.1} parent=5 // pred_check
        %p152 = pneg %p151
      $region22: #{tpu_custom_call.1} parent=5 // pred_check_branch
        %154 = sbr.rel (%p152) target = $region24
      $region23: #{tpu_custom_call.1} parent=5 // pred_region
        // Predicated region
        $region25: #{tpu_custom_call.1} parent=23 // pred_check
          %p155 = pneg %p36
        $region26: #{tpu_custom_call.1} parent=23 // pred_check_branch
          %157 = sbr.rel (%p155) target = $region28
        $region27: #{tpu_custom_call.1} parent=23 // pred_region
          %s158 = sand.u32 %s26, 1
          %s159 = scalar_lea.sflag [#allocation3], %s158
          %s160 = sand.u32 %s26, 1
          %s161 = smul.addr %s160, 8
          %s162 = scalar_lea.vmem [#allocation2], %s161
          %s164 = ssub.s32 128, 128
          %165 = vsyncadd %s159, %s164
          %s166 = smul.addr %s16, 128
          %s167 = scalar_lea.hbm %s0, %s166
          %s169 = sshll.u32 %s162, 4
          %s170 = int_to_ptr.vmem [resolvable:$true] %s169
          %172 = dma.hbm_to_vmem [thread:$0]  %s167, 128, %s170, %s159
        $region28: #{tpu_custom_call.1} parent=23 // pred_fallthru
          _
      $region24: #{tpu_custom_call.1} parent=5 // pred_fallthru
        _
      %p173 = scmp.le.s32.totalorder 1, %s16
      %p174 = scmp.lt.s32.totalorder %s16, 3
      %p175 = pnand %p173, %p174
      %p176 = pneg %p175
      // Predicated region
      $region29: #{tpu_custom_call.1} parent=5 // pred_check
        _
      $region30: #{tpu_custom_call.1} parent=5 // pred_check_branch
        %178 = sbr.rel (%p175) target = $region32
      $region31: #{tpu_custom_call.1} parent=5 // pred_region
        %s179 = ssub.s32 %s16, 1
        %s180 = sand.u32 %s29, 1
        %s181 = scalar_lea.sflag [#allocation3], %s180
        %s182 = sand.u32 %s29, 1
        %s183 = smul.addr %s182, 8
        %s184 = scalar_lea.vmem [#allocation2], %s183
        // Predicated region
        $region33: #{tpu_custom_call.1} parent=31 // pred_check
          %p185 = pneg %p42
        $region34: #{tpu_custom_call.1} parent=31 // pred_check_branch
          %187 = sbr.rel (%p185) target = $region36
        $region35: #{tpu_custom_call.1} parent=31 // pred_region
          %188 = dma.done %s181, 128
        $region36: #{tpu_custom_call.1} parent=31 // pred_fallthru
          _
        // Predicated region
        $region37: #{tpu_custom_call.1} parent=31 // pred_check
          %p189 = pneg %p63
        $region38: #{tpu_custom_call.1} parent=31 // pred_check_branch
          %191 = sbr.rel (%p189) target = $region40
        $region39: #{tpu_custom_call.1} parent=31 // pred_region
          %192 = dma.done [#allocation6], 512
        $region40: #{tpu_custom_call.1} parent=31 // pred_fallthru
          _
        // Predicated region
        $region41: #{tpu_custom_call.1} parent=31 // pred_check
          %p193 = pneg %p84
        $region42: #{tpu_custom_call.1} parent=31 // pred_check_branch
          %195 = sbr.rel (%p193) target = $region44
        $region43: #{tpu_custom_call.1} parent=31 // pred_region
          %196 = dma.done [#allocation6], 256
        $region44: #{tpu_custom_call.1} parent=31 // pred_fallthru
          _
        %s197 = sand.u32 %s29, 1
        %s198 = scalar_lea.sflag [#allocation3], %s197
        %s199 = sand.u32 %s29, 1
        %s200 = smul.addr %s199, 8
        %s201 = scalar_lea.vmem [#allocation2], %s200
        %p202 = pneg %p42
        %p203 = pneg %p39
        %p204 = pneg %p63
        %p205 = pneg %p60
        %p206 = pneg %p84
        %p207 = pneg %p81
        %p208 = pneg %p110
        %p209 = pneg %p107
        %s210 = sand.u32 %s97, 1
        %s211 = scalar_lea.sflag [#allocation4], %s210
        %s212 = sand.u32 %s97, 1
        %s213 = smul.addr %s212, 16
        %s214 = scalar_lea.vmem [#allocation8], %s213
        %v215 = vld [vmem:[%s184] sm:$0xff]
        %v216 = vld [vmem:[#allocation5] sm:$0xff]
        %v217 = vld [vmem:[#allocation5 + $0x8] sm:$0xff]
        %v218 = vld [vmem:[#allocation5 + $0x10] sm:$0xff]
        %v219 = vld [vmem:[#allocation5 + $0x18] sm:$0xff]
        %v220 = vld [vmem:[#allocation7] sm:$0xff]
        %v221 = vld [vmem:[#allocation7 + $0x8] sm:$0xff]
        %vm222 = vcmask 261120
        %v224 = vsel %vm222, %v215, 0
        %226 = vmatprep.subr.mxu0 0.0
        %227 = vmatpush1.msra.mxu0 %v216
        %228 = vmatprep.subr.mxu0 0.0
        %229 = vmatpush1.msra.mxu0 %v217
        %230 = vmatprep.subr.mxu0 0.0
        %231 = vmatpush1.msra.mxu0 %v218
        %232 = vmatprep.subr.mxu0 0.0
        %233 = vmatpush1.msra.mxu0 %v219
        %234 = vmatprep.subr.mxu0 0.0
        %235 = vmatpush1.msra.mxu0 0.0
        %236 = vmatprep.subr.mxu0 0.0
        %237 = vmatpush1.msra.mxu0 0.0
        %238 = vmatprep.subr.mxu0 0.0
        %239 = vmatpush1.msra.mxu0 0.0
        %240 = vmatprep.subr.mxu0 0.0
        %241 = vmatpush1.msra.mxu0 0.0
        %242 = vmatprep.subr.mxu0 0.0
        %243 = vmatpush1.msra.mxu0 0.0
        %244 = vmatprep.subr.mxu0 0.0
        %245 = vmatpush1.msra.mxu0 0.0
        %246 = vmatprep.subr.mxu0 0.0
        %247 = vmatpush1.msra.mxu0 0.0
        %248 = vmatprep.subr.mxu0 0.0
        %249 = vmatpush1.msra.mxu0 0.0
        %250 = vmatprep.subr.mxu0 0.0
        %251 = vmatpush1.msra.mxu0 0.0
        %252 = vmatprep.subr.mxu0 0.0
        %253 = vmatpush1.msra.mxu0 0.0
        %254 = vmatprep.subr.mxu0 0.0
        %255 = vmatpush1.msra.mxu0 0.0
        %256 = vmatprep.subr.mxu0 0.0
        %257 = vmatpush1.msra.mxu0 0.0
        %258 = vmatprep.subr.mxu0 0.0
        %259 = vmatpush1.msra.mxu0 0.0
        %260 = vmatprep.subr.mxu0 0.0
        %261 = vmatpush1.msra.mxu0 0.0
        %262 = vmatprep.subr.mxu0 0.0
        %263 = vmatpush1.msra.mxu0 0.0
        %264 = vmatprep.subr.mxu0 0.0
        %265 = vmatpush1.msra.mxu0 0.0
        %266 = vmatprep.subr.mxu0 0.0
        %267 = vmatpush1.msra.mxu0 0.0
        %268 = vmatprep.subr.mxu0 0.0
        %269 = vmatpush1.msra.mxu0 0.0
        %270 = vmatprep.subr.mxu0 0.0
        %271 = vmatpush1.msra.mxu0 0.0
        %272 = vmatprep.subr.mxu0 0.0
        %273 = vmatpush1.msra.mxu0 0.0
        %274 = vmatprep.subr.mxu0 0.0
        %275 = vmatpush1.msra.mxu0 0.0
        %276 = vmatprep.subr.mxu0 0.0
        %277 = vmatpush1.msra.mxu0 0.0
        %278 = vmatprep.subr.mxu0 0.0
        %279 = vmatpush1.msra.mxu0 0.0
        %280 = vmatprep.subr.mxu0 0.0
        %281 = vmatpush1.msra.mxu0 0.0
        %282 = vmatprep.subr.mxu0 0.0
        %283 = vmatpush1.msra.mxu0 0.0
        %284 = vmatprep.subr.mxu0 0.0
        %285 = vmatpush1.msra.mxu0 0.0
        %286 = vmatprep.subr.mxu0 0.0
        %287 = vmatpush1.msra.mxu0 0.0
        %288 = vmatprep.subr.mxu0 0.0
        %289 = vmatpush1.msra.mxu0 0.0
        %290 = vmatprep.mubr.f32.mxu0 0.0
        %291 = vmatmul.mubr.f32.gmra.mrb[0].mxu0 %v224
        %v292 = vpop.f32.mrb[0].mxu0
        %v293 = vadd.f32 0.0, %v292
        %v294 = vpop.f32.mrb[0].mxu0
        %295 = vdwg.mxu0
        %v296 = vmul.f32 %v293, 0.5
        %v297 = vtanh.pop %v296
        %v298 = vmul.f32 %v297, 0.5
        %v299 = vadd.f32 %v298, 0.5
        %v300 = vmul.f32 %v293, %v299
        %302 = vrot.lane.b32.xlu0 %v300, 120
        %v303 = vpop.permute.xlu0 %302
        %v305 = vadd.f32 %v300, %v303
        %306 = vrot.lane.b32.xlu0 %v300, 112
        %v307 = vpop.permute.xlu0 %306
        %v309 = vadd.f32 %v305, %v307
        %310 = vrot.lane.b32.xlu0 %v300, 104
        %v311 = vpop.permute.xlu0 %310
        %v313 = vadd.f32 %v309, %v311
        %315 = vrot.lane.b32.xlu0 %v313, 104
        %v316 = vpop.permute.xlu0 %315
        %vm318 = vcmask 64512
        %v319 = vsel %vm318, %v313, %v316
        %320 = vrot.lane.b32.xlu0 %v313, 64
        %v321 = vpop.permute.xlu0 %320
        %323 = vrot.lane.b32.xlu0 %v313, 40
        %v324 = vpop.permute.xlu0 %323
        %v326 = vsel %vm318, %v321, %v324
        %v327 = vlaneseq
        %v328 = vshrl.u32 %v327, 7
        %v329 = vadd.s32 %v328, 8
        %v330 = vlaneseq
        %v331 = vand.u32 %v330, 127
        %vm332 = vcmp.eq.s32.totalorder %v328, %v331
        %vm333 = vcmp.eq.s32.totalorder %v329, %v331
        %v334 = vmul.f32 %v319, %v319
        %v335 = vmul.f32 %v326, %v326
        %336 = vxpose.xlu0.b32.start [1/16] %v334, 128
        %337 = vxpose.xlu0.b32.cont [2/16] %v335, 128
        %338 = vxpose.xlu0.b32.cont [3/16] 0.0, 128
        %339 = vxpose.xlu0.b32.cont [4/16] 0.0, 128
        %340 = vxpose.xlu0.b32.cont [5/16] 0.0, 128
        %341 = vxpose.xlu0.b32.cont [6/16] 0.0, 128
        %342 = vxpose.xlu0.b32.cont [7/16] 0.0, 128
        %343 = vxpose.xlu0.b32.cont [8/16] 0.0, 128
        %344 = vxpose.xlu0.b32.cont [9/16] 0.0, 128
        %345 = vxpose.xlu0.b32.cont [10/16] 0.0, 128
        %346 = vxpose.xlu0.b32.cont [11/16] 0.0, 128
        %347 = vxpose.xlu0.b32.cont [12/16] 0.0, 128
        %348 = vxpose.xlu0.b32.cont [13/16] 0.0, 128
        %349 = vxpose.xlu0.b32.cont [14/16] 0.0, 128
        %350 = vxpose.xlu0.b32.cont [15/16] 0.0, 128
        %351 = vxpose.xlu0.b32.end [16/16] 0.0, 128
        %v352 = vpop.trf.xlu0
        %v353 = vpop.trf.xlu0
        %v354 = vpop.trf.xlu0
        %v355 = vpop.trf.xlu0
        %v356 = vpop.trf.xlu0
        %v357 = vpop.trf.xlu0
        %v358 = vpop.trf.xlu0
        %v359 = vpop.trf.xlu0
        %v360 = vpop.trf.xlu0
        %v361 = vpop.trf.xlu0
        %v362 = vpop.trf.xlu0
        %v363 = vpop.trf.xlu0
        %v364 = vpop.trf.xlu0
        %v365 = vpop.trf.xlu0
        %v366 = vpop.trf.xlu0
        %v367 = vpop.trf.xlu0
        %v368 = vadd.f32 %v334, %v352
        %v369 = vadd.f32 %v335, %v353
        %vm370 = vcmask 130048
        %v371 = vsel %vm370, %v368, 0.0
        %372 = vadd.xlane.f32.xlu0 %v371
        %v373 = vpop.xlane.xlu0 %372
        %v374 = vsel %vm370, %v369, 0.0
        %375 = vadd.xlane.f32.xlu0 %v374
        %v376 = vpop.xlane.xlu0 %375
        %v377 = vsub.f32 0.0, %v368
        %v378 = vsub.f32 0.0, %v369
        %v379 = vsel %vm332, %v373, %v377
        %v380 = vsel %vm333, %v376, %v378
        %v382 = vsel %vm370, %v379, 0
        %v385 = vsel %vm370, %v380, 0
        %387 = vmatprep.subr.mxu0 0.0
        %388 = vmatpush1.msra.mxu0 %v220
        %389 = vmatprep.subr.mxu0 0.0
        %390 = vmatpush1.msra.mxu0 %v221
        %391 = vmatprep.subr.mxu0 0.0
        %392 = vmatpush1.msra.mxu0 0.0
        %393 = vmatprep.subr.mxu0 0.0
        %394 = vmatpush1.msra.mxu0 0.0
        %395 = vmatprep.subr.mxu0 0.0
        %396 = vmatpush1.msra.mxu0 0.0
        %397 = vmatprep.subr.mxu0 0.0
        %398 = vmatpush1.msra.mxu0 0.0
        %399 = vmatprep.subr.mxu0 0.0
        %400 = vmatpush1.msra.mxu0 0.0
        %401 = vmatprep.subr.mxu0 0.0
        %402 = vmatpush1.msra.mxu0 0.0
        %403 = vmatprep.subr.mxu0 0.0
        %404 = vmatpush1.msra.mxu0 0.0
        %405 = vmatprep.subr.mxu0 0.0
        %406 = vmatpush1.msra.mxu0 0.0
        %407 = vmatprep.subr.mxu0 0.0
        %408 = vmatpush1.msra.mxu0 0.0
        %409 = vmatprep.subr.mxu0 0.0
        %410 = vmatpush1.msra.mxu0 0.0
        %411 = vmatprep.subr.mxu0 0.0
        %412 = vmatpush1.msra.mxu0 0.0
        %413 = vmatprep.subr.mxu0 0.0
        %414 = vmatpush1.msra.mxu0 0.0
        %415 = vmatprep.subr.mxu0 0.0
        %416 = vmatpush1.msra.mxu0 0.0
        %417 = vmatprep.subr.mxu0 0.0
        %418 = vmatpush1.msra.mxu0 0.0
        %419 = vmatprep.subr.mxu0 0.0
        %420 = vmatpush1.msra.mxu0 0.0
        %421 = vmatprep.subr.mxu0 0.0
        %422 = vmatpush1.msra.mxu0 0.0
        %423 = vmatprep.subr.mxu0 0.0
        %424 = vmatpush1.msra.mxu0 0.0
        %425 = vmatprep.subr.mxu0 0.0
        %426 = vmatpush1.msra.mxu0 0.0
        %427 = vmatprep.subr.mxu0 0.0
        %428 = vmatpush1.msra.mxu0 0.0
        %429 = vmatprep.subr.mxu0 0.0
        %430 = vmatpush1.msra.mxu0 0.0
        %431 = vmatprep.subr.mxu0 0.0
        %432 = vmatpush1.msra.mxu0 0.0
        %433 = vmatprep.subr.mxu0 0.0
        %434 = vmatpush1.msra.mxu0 0.0
        %435 = vmatprep.subr.mxu0 0.0
        %436 = vmatpush1.msra.mxu0 0.0
        %437 = vmatprep.subr.mxu0 0.0
        %438 = vmatpush1.msra.mxu0 0.0
        %439 = vmatprep.subr.mxu0 0.0
        %440 = vmatpush1.msra.mxu0 0.0
        %441 = vmatprep.subr.mxu0 0.0
        %442 = vmatpush1.msra.mxu0 0.0
        %443 = vmatprep.subr.mxu0 0.0
        %444 = vmatpush1.msra.mxu0 0.0
        %445 = vmatprep.subr.mxu0 0.0
        %446 = vmatpush1.msra.mxu0 0.0
        %447 = vmatprep.subr.mxu0 0.0
        %448 = vmatpush1.msra.mxu0 0.0
        %449 = vmatprep.subr.mxu0 0.0
        %450 = vmatpush1.msra.mxu0 0.0
        %451 = vmatprep.mubr.f32.mxu0 0.0
        %452 = vmatmul.mubr.f32.gmra.mrb[0].mxu0 %v382
        %v453 = vpop.f32.mrb[0].mxu0
        %v454 = vadd.f32 0.0, %v453
        %v455 = vpop.f32.mrb[0].mxu0
        %456 = vmatprep.mubr.f32.mxu0 0.0
        %457 = vmatmul.mubr.f32.gmra.mrb[0].mxu0 %v385
        %v458 = vpop.f32.mrb[0].mxu0
        %v459 = vadd.f32 0.0, %v458
        %v460 = vpop.f32.mrb[0].mxu0
        %461 = vdwg.mxu0
        %vm462 = vcmask 523264
        %463 = vst.msk [vmem:[%s214] sm:$0xff] %vm462, %v454
        %464 = vst.msk [vmem:[%s214 + $0x8] sm:$0xff] %vm462, %v459
        %s465 = sand.u32 %s97, 1
        %s466 = scalar_lea.sflag [#allocation4], %s465
        %s467 = sand.u32 %s97, 1
        %s468 = smul.addr %s467, 16
        %s469 = scalar_lea.vmem [#allocation8], %s468
        // Predicated region
        $region45: #{tpu_custom_call.1} parent=31 // pred_check
          %p470 = pneg %p107
        $region46: #{tpu_custom_call.1} parent=31 // pred_check_branch
          %472 = sbr.rel (%p470) target = $region48
        $region47: #{tpu_custom_call.1} parent=31 // pred_region
          %s474 = ssub.s32 256, 256
          %475 = vsyncadd %s466, %s474
          %s476 = smul.addr %s21, 2
          %s477 = smul.addr %s476, 128
          %s478 = scalar_lea.hbm %s3, %s477
          %s479 = sshll.u32 %s469, 4
          %s480 = int_to_ptr.vmem [resolvable:$true] %s479
          %485 = dma.vmem_to_hbm [thread:$0]  %s480, 256, %s478, %s466, 128, 128, 8
        $region48: #{tpu_custom_call.1} parent=31 // pred_fallthru
          _
      $region32: #{tpu_custom_call.1} parent=5 // pred_fallthru
        _
      %p486 = scmp.le.s32.totalorder 2, %s16
      // Predicated region
      $region49: #{tpu_custom_call.1} parent=5 // pred_check
        %p487 = pneg %p486
      $region50: #{tpu_custom_call.1} parent=5 // pred_check_branch
        %489 = sbr.rel (%p487) target = $region52
      $region51: #{tpu_custom_call.1} parent=5 // pred_region
        %s490 = ssub.s32 %s16, 2
        // Predicated region
        $region53: #{tpu_custom_call.1} parent=51 // pred_check
          %p491 = pneg %p113
        $region54: #{tpu_custom_call.1} parent=51 // pred_check_branch
          %493 = sbr.rel (%p491) target = $region56
        $region55: #{tpu_custom_call.1} parent=51 // pred_region
          %s494 = sand.u32 %s98, 1
          %s495 = scalar_lea.sflag [#allocation4], %s494
          %s496 = sand.u32 %s98, 1
          %s497 = smul.addr %s496, 16
          %s498 = scalar_lea.vmem [#allocation8], %s497
          %499 = dma.done %s495, 256
        $region56: #{tpu_custom_call.1} parent=51 // pred_fallthru
          _
      $region52: #{tpu_custom_call.1} parent=5 // pred_fallthru
        _
    $region6: #{tpu_custom_call.1} parent=1 // loop_footer
      %s20 = sadd.s32 1, %s16
    $region7: #{tpu_custom_call.1} parent=1 // loop_footer_branch
      %15 = sbr.rel target = $region3
    $region8: #{tpu_custom_call.1} parent=1 // loop_exit
      _
    %500 = vsyncpa [#allocation3], 1
    %s501 = scalar_lea.sflag [#allocation3], 1
    %502 = vsyncpa %s501, 1
    %503 = vsyncpa [#allocation6], 1
    %504 = vsyncpa [#allocation4], 1
    %s505 = scalar_lea.sflag [#allocation4], 1
    %506 = vsyncpa %s505, 1

</llo_original>
